<compile_context>
chip_gen: v7x
topology: tpu7x:2x2x1
jax: 0.10.0
libtpu: 0.0.40
codegen_flags: <defaults>
</compile_context>

<pallas_src>
import jax
import jax.numpy as jnp
from jax import lax
from jax.experimental import pallas as pl
from jax.experimental.pallas import tpu as pltpu

# --- Hyperparameters relevant to the zloss path ------------------------------
SIGMA = 0.6
D_CONST = 2.0 * SIGMA * SIGMA  # self.d in the PyTorch module
NUM_FLOWS = 4                  # Hyperparameters.num_flows
NUM_GROUPS = 8                 # Hyperparameters.num_groups (z channels)

_ACC_W = 512                   # fixed accumulator lane width (multiple of 128)
_STEP_BYTES_TARGET = 8 << 20   # ~8 MiB streamed per grid step (HBM-bound regime)
_INPUT_VMEM_BUDGET = 32 << 20  # cap on double-buffered input bytes (v7x-safe)


def _round_up(x, m):
    return ((x + m - 1) // m) * m


def _make_zloss_kernel(num_flows, inv_d, inv_n, rows_z, rows_s,
                       t_total, t_tile, acc_w):
    """Builds the tiled running-reduction kernel."""
    needs_mask = (t_total % t_tile) != 0

    # Static chunk decomposition of the time tile: full acc_w-wide chunks plus
    # one (possibly narrower) remainder chunk; all widths are multiples of 128.
    chunks = []
    off = 0
    while off < t_tile:
        w = min(acc_w, t_tile - off)
        chunks.append((off, w))
        off += w

    def kernel(lw_ref, *refs):
        z_ref = refs[0]
        s_refs = refs[1:1 + num_flows]
        out_ref = refs[1 + num_flows]
        acc_z = refs[2 + num_flows]     # (rows_z, acc_w) f32 VMEM scratch
        acc_s = refs[3 + num_flows]     # (rows_s, acc_w) f32 VMEM scratch

        t = pl.program_id(0)
        last = pl.num_programs(0) - 1

        @pl.when(t == 0)
        def _init():
            acc_z[...] = jnp.zeros_like(acc_z)
            acc_s[...] = jnp.zeros_like(acc_s)

        def accumulate(masked):
            # Pure VPU work (mul/add); cross-lane reduce deferred to finalize.
            # Chunked so the live vreg working set stays small even for wide
            # time tiles, and the accumulators stay at a fixed lane width.
            base = t * t_tile
            for off, w in chunks:
                z = z_ref[:, off:off + w].astype(jnp.float32)
                zsq = z * z
                s_sum = s_refs[0][:, off:off + w].astype(jnp.float32)
                for r in s_refs[1:]:
                    s_sum = s_sum + r[:, off:off + w].astype(jnp.float32)
                if masked:
                    # Tail: zero lanes past the true T so padded garbage never
                    # enters the accumulators (select, not multiply-by-mask).
                    col_z = lax.broadcasted_iota(jnp.int32, (rows_z, w), 1)
                    zsq = jnp.where(base + off + col_z < t_total, zsq, 0.0)
                    col_s = lax.broadcasted_iota(jnp.int32, (rows_s, w), 1)
                    s_sum = jnp.where(base + off + col_s < t_total, s_sum, 0.0)
                acc_z[:, :w] += zsq
                acc_s[:, :w] += s_sum

        if needs_mask:
            # Two paths: unmasked steady state, masked final tile only.
            @pl.when(t < last)
            def _steady():
                accumulate(masked=False)

            @pl.when(t == last)
            def _tail():
                accumulate(masked=True)
        else:
            accumulate(masked=False)

        @pl.when(t == last)
        def _finalize():
            zz_total = jnp.sum(acc_z[...])
            ls_total = jnp.sum(acc_s[...])
            lw_total = lw_ref[0, 0]
            # (1,1) SMEM output block is grid-resident; written only here.
            out_ref[0, 0] = (zz_total * inv_d - ls_total - lw_total) * inv_n

    return kernel


def loss_forward(z, log_s_list, log_w_list, p_wavs=None, r_wavs=None,
                 t_tile=None):
    """JAX/Pallas equivalent of Loss.forward(model_output, p_wavs, r_wavs)."""
    B, C, T = z.shape
    n_elems = B * C * T
    num_flows = len(log_s_list)

    # Lane-dense 2-D views, B folded into rows; no dtype cast, no jnp.stack.
    z2d = z.reshape(B * C, T)
    s2d = [s.reshape(-1, T) for s in log_s_list]
    rows_z = z2d.shape[0]
    rows_s = s2d[0].shape[0]

    # log_w is tiny (num_flows * C * C elements) and pads to ~94% masked lanes:
    # reduce it in plain XLA and feed the scalar into the kernel finalize.
    lw_sum = jnp.zeros((), jnp.float32)
    for w in log_w_list:
        lw_sum = lw_sum + jnp.sum(w.astype(jnp.float32))
    lw_sum = lw_sum.reshape(1, 1)

    # --- time-tile selection ---------------------------------------------
    # The kernel is pure HBM bandwidth: pick a tile so each grid step streams
    # several MiB (>> the ~0.35 us fixed per-step cost), bounded by padded T
    # (small problems -> single grid step) and the double-buffer VMEM budget.
    T_pad = _round_up(T, 128)
    bytes_per_col = (rows_z * z2d.dtype.itemsize
                     + num_flows * rows_s * s2d[0].dtype.itemsize)
    if t_tile is None:
        t_tile = _STEP_BYTES_TARGET // max(bytes_per_col, 1)
    t_tile = min(t_tile, _INPUT_VMEM_BUDGET // (2 * max(bytes_per_col, 1)))
    tT = max(128, min(_round_up(t_tile, 128), T_pad))
    acc_w = min(_ACC_W, tT)
    num_t = pl.cdiv(T, tT)

    # Explicit VMEM limit matched to the tile: 2x double-buffered inputs +
    # fixed-width accumulators + slack.  Kept <= 48 MiB so it also fits v7x.
    def _pad_rows(r):
        return _round_up(r, 16)
    in_bytes = tT * (_pad_rows(rows_z) * z2d.dtype.itemsize
                     + num_flows * _pad_rows(rows_s) * s2d[0].dtype.itemsize)
    acc_bytes = (_pad_rows(rows_z) + _pad_rows(rows_s)) * acc_w * 4
    vmem_need = 2 * in_bytes + acc_bytes
    vmem_limit = int(min(max(vmem_need + (8 << 20), 32 << 20), 48 << 20))

    kernel = _make_zloss_kernel(
        num_flows, 1.0 / D_CONST, 1.0 / float(n_elems),
        rows_z, rows_s, T, tT, acc_w)

    in_specs = [
        # (1,1) f32 scalar, resident in SMEM across the whole grid.
        pl.BlockSpec(memory_space=pltpu.MemorySpace.SMEM),
        # z: full rows, tile only T.
        pl.BlockSpec((rows_z, tT), lambda t: (0, t)),
    ] + [
        # one input stream per flow's log_s: full rows, tile only T.
        pl.BlockSpec((rows_s, tT), lambda t: (0, t))
        for _ in range(num_flows)
    ]

    zloss_arr = pl.pallas_call(
        kernel,
        out_shape=jax.ShapeDtypeStruct((1, 1), jnp.float32),
        grid=(num_t,),
        in_specs=in_specs,
        out_specs=pl.BlockSpec(memory_space=pltpu.MemorySpace.SMEM),
        scratch_shapes=[
            pltpu.VMEM((rows_z, acc_w), jnp.float32),
            pltpu.VMEM((rows_s, acc_w), jnp.float32),
        ],
        # T is a reduction axis (accumulators persist across it) -> "arbitrary".
        # On v7x: prepend a size-2 pltpu.CORE_PARALLEL axis splitting the T
        # range per TensorCore with per-core partial sums for ~2x HBM BW.
        compiler_params=pltpu.CompilerParams(
            dimension_semantics=("arbitrary",),
            vmem_limit_bytes=vmem_limit),
    )(lw_sum, z2d, *s2d)

    zloss = zloss_arr[0, 0]

    if p_wavs is not None:
        # TODO(synk): MultiResolutionSTFTLoss (FFT-based) has no clean Pallas
        # equivalent; only the p_wavs=None branch is supported.
        raise NotImplementedError("STFT loss branch not implemented in Pallas")
    sloss = 0.0 * zloss

    return zloss + sloss, zloss, sloss


if __name__ == "__main__":
    key = jax.random.PRNGKey(0)
    B, C, T = 2, NUM_GROUPS, 640  # small shapes consistent with the module

    k_z, k_s, k_w = jax.random.split(key, 3)
    z = jax.random.normal(k_z, (B, C, T), dtype=jnp.float32)

    # num_flows affine-coupling log_s terms (half the channels each) and
    # invertible-conv log-weight terms (C x C), deterministically generated.
    s_keys = jax.random.split(k_s, NUM_FLOWS)
    w_keys = jax.random.split(k_w, NUM_FLOWS)
    log_s_list = [0.1 * jax.random.normal(s_keys[i], (B, C // 2, T), jnp.float32)
                  for i in range(NUM_FLOWS)]
    log_w_list = [0.05 * jax.random.normal(w_keys[i], (C, C), jnp.float32)
                  for i in range(NUM_FLOWS)]

    # Pure-JAX reference of the zloss path.
    ref_zloss = (jnp.sum(z * z) / D_CONST
                 - sum(jnp.sum(s) for s in log_s_list)
                 - sum(jnp.sum(w) for w in log_w_list)) / (B * C * T)

    # 1) Auto tile: T=640 collapses to a single masked 768-lane step with
    #    chunked (512 + 256) accumulation.
    total, zloss, sloss = loss_forward(z, log_s_list, log_w_list, p_wavs=None)
    jax.block_until_ready(total)
    assert jnp.allclose(zloss, ref_zloss, rtol=1e-5, atol=1e-5), (zloss, ref_zloss)
    assert jnp.allclose(total, ref_zloss, rtol=1e-5, atol=1e-5)
    assert jnp.allclose(sloss, 0.0)

    # 2) Explicit small tile: multi-step pipeline (unmasked steady state +
    #    masked tail) over the same data, same result.
    total2, zloss2, _ = loss_forward(z, log_s_list, log_w_list, p_wavs=None,
                                     t_tile=256)
    jax.block_until_ready(total2)
    assert jnp.allclose(zloss2, ref_zloss, rtol=1e-5, atol=1e-5), (zloss2, ref_zloss)

    print("KERNEL_OK")
</pallas_src>

<mosaic_0001>
module attributes {stable_mosaic.version = 11 : i64} {
  func.func @kernel(%arg0: i32, %arg1: memref<1x1xf32, #tpu.memory_space<smem>>, %arg2: memref<16x640xf32, #tpu.memory_space<vmem>>, %arg3: memref<8x640xf32, #tpu.memory_space<vmem>>, %arg4: memref<8x640xf32, #tpu.memory_space<vmem>>, %arg5: memref<8x640xf32, #tpu.memory_space<vmem>>, %arg6: memref<8x640xf32, #tpu.memory_space<vmem>>, %arg7: memref<1x1xf32, #tpu.memory_space<smem>>, %arg8: memref<16x512xf32, #tpu.memory_space<vmem>>, %arg9: memref<8x512xf32, #tpu.memory_space<vmem>>) attributes {dimension_semantics = [#tpu.dimension_semantics<arbitrary>], iteration_bounds = array<i64: 1>, scalar_prefetch = 0 : i64, scratch_operands = 2 : i64, tpu.core_type = #tpu.core_type<tc>, window_params = [{transform_indices = @transform_0, window_bounds = array<i64: 1, 1>}, {transform_indices = @transform_1, window_bounds = array<i64: 16, 640>}, {transform_indices = @transform_2, window_bounds = array<i64: 8, 640>}, {transform_indices = @transform_3, window_bounds = array<i64: 8, 640>}, {transform_indices = @transform_4, window_bounds = array<i64: 8, 640>}, {transform_indices = @transform_5, window_bounds = array<i64: 8, 640>}, {transform_indices = @transform_6, window_bounds = array<i64: 1, 1>}]} {
    %c0_i32 = arith.constant 0 : i32
    %0 = arith.cmpi eq, %arg0, %c0_i32 : i32
    %1 = arith.extui %0 : i1 to i32
    %c0_i32_0 = arith.constant 0 : i32
    %2 = arith.cmpi ne, %1, %c0_i32_0 : i32
    scf.if %2 {
      %cst = arith.constant 0.000000e+00 : f32
      %36 = vector.broadcast %cst : f32 to vector<16x512xf32>
      %c0_37 = arith.constant 0 : index
      %c0_38 = arith.constant 0 : index
      %37 = vector.load %arg8[%c0_37, %c0_38] : memref<16x512xf32, #tpu.memory_space<vmem>>, vector<16x512xf32>
      tpu.vector_store %arg8[%c0_37, %c0_38], %36 {strides = array<i32>} : memref<16x512xf32, #tpu.memory_space<vmem>>, vector<16x512xf32>,
      %cst_39 = arith.constant 0.000000e+00 : f32
      %38 = vector.broadcast %cst_39 : f32 to vector<8x512xf32>
      %c0_40 = arith.constant 0 : index
      %c0_41 = arith.constant 0 : index
      %39 = vector.load %arg9[%c0_40, %c0_41] : memref<8x512xf32, #tpu.memory_space<vmem>>, vector<8x512xf32>
      tpu.vector_store %arg9[%c0_40, %c0_41], %38 {strides = array<i32>} : memref<8x512xf32, #tpu.memory_space<vmem>>, vector<8x512xf32>,
    } else {
    }
    %c0 = arith.constant 0 : index
    %c0_1 = arith.constant 0 : index
    %3 = vector.load %arg2[%c0, %c0_1] : memref<16x640xf32, #tpu.memory_space<vmem>>, vector<16x512xf32>
    %4 = arith.mulf %3, %3 : vector<16x512xf32>
    %c0_2 = arith.constant 0 : index
    %c0_3 = arith.constant 0 : index
    %5 = vector.load %arg3[%c0_2, %c0_3] : memref<8x640xf32, #tpu.memory_space<vmem>>, vector<8x512xf32>
    %c0_4 = arith.constant 0 : index
    %c0_5 = arith.constant 0 : index
    %6 = vector.load %arg4[%c0_4, %c0_5] : memref<8x640xf32, #tpu.memory_space<vmem>>, vector<8x512xf32>
    %7 = arith.addf %5, %6 : vector<8x512xf32>
    %c0_6 = arith.constant 0 : index
    %c0_7 = arith.constant 0 : index
    %8 = vector.load %arg5[%c0_6, %c0_7] : memref<8x640xf32, #tpu.memory_space<vmem>>, vector<8x512xf32>
    %9 = arith.addf %7, %8 : vector<8x512xf32>
    %c0_8 = arith.constant 0 : index
    %c0_9 = arith.constant 0 : index
    %10 = vector.load %arg6[%c0_8, %c0_9] : memref<8x640xf32, #tpu.memory_space<vmem>>, vector<8x512xf32>
    %11 = arith.addf %9, %10 : vector<8x512xf32>
    %c0_10 = arith.constant 0 : index
    %c0_11 = arith.constant 0 : index
    %12 = vector.load %arg8[%c0_10, %c0_11] : memref<16x512xf32, #tpu.memory_space<vmem>>, vector<16x512xf32>
    %13 = arith.addf %12, %4 : vector<16x512xf32>
    %c0_12 = arith.constant 0 : index
    %c0_13 = arith.constant 0 : index
    %14 = vector.load %arg8[%c0_12, %c0_13] : memref<16x512xf32, #tpu.memory_space<vmem>>, vector<16x512xf32>
    tpu.vector_store %arg8[%c0_12, %c0_13], %13 {strides = array<i32>} : memref<16x512xf32, #tpu.memory_space<vmem>>, vector<16x512xf32>,
    %c0_14 = arith.constant 0 : index
    %c0_15 = arith.constant 0 : index
    %15 = vector.load %arg9[%c0_14, %c0_15] : memref<8x512xf32, #tpu.memory_space<vmem>>, vector<8x512xf32>
    %16 = arith.addf %15, %11 : vector<8x512xf32>
    %c0_16 = arith.constant 0 : index
    %c0_17 = arith.constant 0 : index
    %17 = vector.load %arg9[%c0_16, %c0_17] : memref<8x512xf32, #tpu.memory_space<vmem>>, vector<8x512xf32>
    tpu.vector_store %arg9[%c0_16, %c0_17], %16 {strides = array<i32>} : memref<8x512xf32, #tpu.memory_space<vmem>>, vector<8x512xf32>,
    %c0_18 = arith.constant 0 : index
    %c512 = arith.constant 512 : index
    %18 = vector.load %arg2[%c0_18, %c512] : memref<16x640xf32, #tpu.memory_space<vmem>>, vector<16x128xf32>
    %19 = arith.mulf %18, %18 : vector<16x128xf32>
    %c0_19 = arith.constant 0 : index
    %c512_20 = arith.constant 512 : index
    %20 = vector.load %arg3[%c0_19, %c512_20] : memref<8x640xf32, #tpu.memory_space<vmem>>, vector<8x128xf32>
    %c0_21 = arith.constant 0 : index
    %c512_22 = arith.constant 512 : index
    %21 = vector.load %arg4[%c0_21, %c512_22] : memref<8x640xf32, #tpu.memory_space<vmem>>, vector<8x128xf32>
    %22 = arith.addf %20, %21 : vector<8x128xf32>
    %c0_23 = arith.constant 0 : index
    %c512_24 = arith.constant 512 : index
    %23 = vector.load %arg5[%c0_23, %c512_24] : memref<8x640xf32, #tpu.memory_space<vmem>>, vector<8x128xf32>
    %24 = arith.addf %22, %23 : vector<8x128xf32>
    %c0_25 = arith.constant 0 : index
    %c512_26 = arith.constant 512 : index
    %25 = vector.load %arg6[%c0_25, %c512_26] : memref<8x640xf32, #tpu.memory_space<vmem>>, vector<8x128xf32>
    %26 = arith.addf %24, %25 : vector<8x128xf32>
    %c0_27 = arith.constant 0 : index
    %c0_28 = arith.constant 0 : index
    %27 = vector.load %arg8[%c0_27, %c0_28] : memref<16x512xf32, #tpu.memory_space<vmem>>, vector<16x128xf32>
    %28 = arith.addf %27, %19 : vector<16x128xf32>
    %c0_29 = arith.constant 0 : index
    %c0_30 = arith.constant 0 : index
    %29 = vector.load %arg8[%c0_29, %c0_30] : memref<16x512xf32, #tpu.memory_space<vmem>>, vector<16x128xf32>
    tpu.vector_store %arg8[%c0_29, %c0_30], %28 {strides = array<i32>} : memref<16x512xf32, #tpu.memory_space<vmem>>, vector<16x128xf32>,
    %c0_31 = arith.constant 0 : index
    %c0_32 = arith.constant 0 : index
    %30 = vector.load %arg9[%c0_31, %c0_32] : memref<8x512xf32, #tpu.memory_space<vmem>>, vector<8x128xf32>
    %31 = arith.addf %30, %26 : vector<8x128xf32>
    %c0_33 = arith.constant 0 : index
    %c0_34 = arith.constant 0 : index
    %32 = vector.load %arg9[%c0_33, %c0_34] : memref<8x512xf32, #tpu.memory_space<vmem>>, vector<8x128xf32>
    tpu.vector_store %arg9[%c0_33, %c0_34], %31 {strides = array<i32>} : memref<8x512xf32, #tpu.memory_space<vmem>>, vector<8x128xf32>,
    %c0_i32_35 = arith.constant 0 : i32
    %33 = arith.cmpi eq, %arg0, %c0_i32_35 : i32
    %34 = arith.extui %33 : i1 to i32
    %c0_i32_36 = arith.constant 0 : i32
    %35 = arith.cmpi ne, %34, %c0_i32_36 : i32
    scf.if %35 {
      %c0_37 = arith.constant 0 : index
      %c0_38 = arith.constant 0 : index
      %36 = vector.load %arg8[%c0_37, %c0_38] : memref<16x512xf32, #tpu.memory_space<vmem>>, vector<16x512xf32>
      %37 = vector.shape_cast %36 : vector<16x512xf32> to vector<1x16x512xf32>
      %cst = arith.constant dense<0.000000e+00> : vector<1xf32>
      %38 = vector.multi_reduction <add>, %37, %cst [1, 2] : vector<1x16x512xf32> to vector<1xf32>
      %39 = vector.shape_cast %38 : vector<1xf32> to vector<1x1x1xf32>
      %40 = vector.extract %39[0, 0, 0] : f32 from vector<1x1x1xf32>
      %c0_39 = arith.constant 0 : index
      %c0_40 = arith.constant 0 : index
      %41 = vector.load %arg9[%c0_39, %c0_40] : memref<8x512xf32, #tpu.memory_space<vmem>>, vector<8x512xf32>
      %42 = vector.shape_cast %41 : vector<8x512xf32> to vector<1x8x512xf32>
      %cst_41 = arith.constant dense<0.000000e+00> : vector<1xf32>
      %43 = vector.multi_reduction <add>, %42, %cst_41 [1, 2] : vector<1x8x512xf32> to vector<1xf32>
      %44 = vector.shape_cast %43 : vector<1xf32> to vector<1x1x1xf32>
      %45 = vector.extract %44[0, 0, 0] : f32 from vector<1x1x1xf32>
      %c0_42 = arith.constant 0 : index
      %c0_43 = arith.constant 0 : index
      %46 = memref.load %arg1[%c0_42, %c0_43] : memref<1x1xf32, #tpu.memory_space<smem>>
      %cst_44 = arith.constant 1.38888884 : f32
      %47 = arith.mulf %40, %cst_44 : f32
      %48 = arith.subf %47, %45 : f32
      %49 = arith.subf %48, %46 : f32
      %cst_45 = arith.constant 9.76562514E-5 : f32
      %50 = arith.mulf %49, %cst_45 : f32
      %c0_46 = arith.constant 0 : index
      %c0_47 = arith.constant 0 : index
      %51 = memref.load %arg7[%c0_46, %c0_47] : memref<1x1xf32, #tpu.memory_space<smem>>
      memref.store %50, %arg7[%c0_46, %c0_47] : memref<1x1xf32, #tpu.memory_space<smem>>
    } else {
    }
    return
  }
  func.func @transform_0(%arg0: i32) -> (i32, i32) {
    %c0_i32 = arith.constant 0 : i32
    %c0_i32_0 = arith.constant 0 : i32
    %c0_i32_1 = arith.constant 0 : i32
    return %c0_i32, %c0_i32_0 : i32, i32
  }
  func.func @transform_1(%arg0: i32) -> (i32, i32) {
    %c0_i32 = arith.constant 0 : i32
    %c0_i32_0 = arith.constant 0 : i32
    return %c0_i32, %arg0 : i32, i32
  }
  func.func @transform_2(%arg0: i32) -> (i32, i32) {
    %c0_i32 = arith.constant 0 : i32
    %c0_i32_0 = arith.constant 0 : i32
    return %c0_i32, %arg0 : i32, i32
  }
  func.func @transform_3(%arg0: i32) -> (i32, i32) {
    %c0_i32 = arith.constant 0 : i32
    %c0_i32_0 = arith.constant 0 : i32
    return %c0_i32, %arg0 : i32, i32
  }
  func.func @transform_4(%arg0: i32) -> (i32, i32) {
    %c0_i32 = arith.constant 0 : i32
    %c0_i32_0 = arith.constant 0 : i32
    return %c0_i32, %arg0 : i32, i32
  }
  func.func @transform_5(%arg0: i32) -> (i32, i32) {
    %c0_i32 = arith.constant 0 : i32
    %c0_i32_0 = arith.constant 0 : i32
    return %c0_i32, %arg0 : i32, i32
  }
  func.func @transform_6(%arg0: i32) -> (i32, i32) {
    %c0_i32 = arith.constant 0 : i32
    %c0_i32_0 = arith.constant 0 : i32
    %c0_i32_1 = arith.constant 0 : i32
    return %c0_i32, %c0_i32_0 : i32, i32
  }
}

</mosaic_0001>

<llo_original>
// kernel: tpu_custom_call.1
$region0: #{tpu_custom_call.1}
  #allocation0 [shape = 'u32[]', space=smem, size = 0x4, offset = 0x4, fixed_abs, tag = 'smem constant byte address 0x4 - core index']
  #allocation1 [shape = 'u32[144,128]{1,0:T(1,128)}', space=vmem, size = 0x12000, scoped, tag = 'internal scratch']
  #allocation2 [shape = 'f32[16,512]{1,0:T(8,128)}', space=vmem, size = 0x8000, scoped, tag = 'scratch operand']
  #allocation3 [shape = 'f32[8,512]{1,0:T(8,128)}', space=vmem, size = 0x4000, scoped, tag = 'scratch operand']
  #allocation4 [shape = 'f32[1,1]{1,0:T(1,128)S(6)}', space=smem, size = 0x200, scoped, tag = 'scoped memory for tpu_custom_call.1']
  %s0 = inlined_call_operand.<no memory space> [shape: f32[1,1], index: 0, kind: input, shape index: {}]
  %s1 = inlined_call_operand.hbm [shape: f32[16,640], index: 1, kind: input, shape index: {}]
  %s2 = inlined_call_operand.hbm [shape: f32[8,640], index: 2, kind: input, shape index: {}]
  %s3 = inlined_call_operand.hbm [shape: f32[8,640], index: 3, kind: input, shape index: {}]
  %s4 = inlined_call_operand.hbm [shape: f32[8,640], index: 4, kind: input, shape index: {}]
  %s5 = inlined_call_operand.hbm [shape: f32[8,640], index: 5, kind: input, shape index: {}]
  %s6 = inlined_call_operand.hbm [shape: f32[1,1], index: 6, kind: output, shape index: {}]
  %s7 = sld [smem:[#allocation0]]
  $region62: #{tpu_custom_call.1} parent=0
    _
  %s9 = ssub.s32 1, %s7
  %s10 = scalar_select 0, %s9, %s7
  %11 = sst [smem:[#allocation4]] %s0
  $region1: #{tpu_custom_call.1} parent=0
    #allocation5 [shape = 'u8[40960]{0}', space=vmem, size = 0xa000, scoped, tag = 'input window, operand 1, single buffered']
    #allocation6 [shape = 's32[1]{0}', space=sflag, size = 0x4, scoped, tag = 'scoped memory for tpu_custom_call.1']
    #allocation7 [shape = 's32[1]{0}', space=sflag, size = 0x4, scoped, tag = 'scoped memory for tpu_custom_call.1']
    #allocation8 [shape = 'u8[20480]{0}', space=vmem, size = 0x5000, scoped, tag = 'input window, operand 2, single buffered']
    #allocation9 [shape = 's32[1]{0}', space=sflag, size = 0x4, scoped, tag = 'scoped memory for tpu_custom_call.1']
    #allocation10 [shape = 'u8[20480]{0}', space=vmem, size = 0x5000, scoped, tag = 'input window, operand 3, single buffered']
    #allocation11 [shape = 'u8[20480]{0}', space=vmem, size = 0x5000, scoped, tag = 'input window, operand 4, single buffered']
    #allocation12 [shape = 's32[1]{0}', space=sflag, size = 0x4, scoped, tag = 'scoped memory for tpu_custom_call.1']
    #allocation13 [shape = 'u8[20480]{0}', space=vmem, size = 0x5000, scoped, tag = 'input window, operand 5, single buffered']
    #allocation14 [shape = 'u8[512]{0}', space=smem, size = 0x200, scoped, tag = 'output window, operand 0, single buffered']
    %12 = vsyncpa [#allocation6], 0
    %13 = vsyncpa [#allocation9], 0
    %14 = vsyncpa [#allocation12], 0
    %15 = vsyncpa [#allocation7], 0
    // Predicated region
    $region2: #{tpu_custom_call.1} parent=1 // pred_check
      _
    $region3: #{tpu_custom_call.1} parent=1 // pred_check_branch
      %17 = sbr.rel (0) target = $region5
    $region4: #{tpu_custom_call.1} parent=1 // pred_region
      _
    $region5: #{tpu_custom_call.1} parent=1 // pred_fallthru
      _
    // Predicated region
    $region6: #{tpu_custom_call.1} parent=1 // pred_check
      _
    $region7: #{tpu_custom_call.1} parent=1 // pred_check_branch
      %19 = sbr.rel (0) target = $region9
    $region8: #{tpu_custom_call.1} parent=1 // pred_region
      %s21 = ssub.s32 1280, 1280
      %22 = vsyncadd [#allocation6], %s21
      %s23 = sshll.u32 [#allocation5], 4
      %s24 = int_to_ptr.vmem [resolvable:$true] %s23
      %29 = dma.hbm_to_vmem [thread:$0]  %s1, 1280, %s24, [#allocation6], 640, 640, 40
    $region9: #{tpu_custom_call.1} parent=1 // pred_fallthru
      _
    // Predicated region
    $region10: #{tpu_custom_call.1} parent=1 // pred_check
      _
    $region11: #{tpu_custom_call.1} parent=1 // pred_check_branch
      %31 = sbr.rel (0) target = $region13
    $region12: #{tpu_custom_call.1} parent=1 // pred_region
      %s33 = ssub.s32 640, 640
      %34 = vsyncadd [#allocation9], %s33
      %s36 = sshll.u32 [#allocation8], 4
      %s37 = int_to_ptr.vmem [resolvable:$true] %s36
      %39 = dma.hbm_to_vmem [thread:$0]  %s2, 640, %s37, [#allocation9]
    $region13: #{tpu_custom_call.1} parent=1 // pred_fallthru
      _
    // Predicated region
    $region14: #{tpu_custom_call.1} parent=1 // pred_check
      _
    $region15: #{tpu_custom_call.1} parent=1 // pred_check_branch
      %41 = sbr.rel (0) target = $region17
    $region16: #{tpu_custom_call.1} parent=1 // pred_region
      %s43 = ssub.s32 640, 640
      %44 = vsyncadd [#allocation9], %s43
      %s46 = sshll.u32 [#allocation10], 4
      %s47 = int_to_ptr.vmem [resolvable:$true] %s46
      %49 = dma.hbm_to_vmem [thread:$0]  %s3, 640, %s47, [#allocation9]
    $region17: #{tpu_custom_call.1} parent=1 // pred_fallthru
      _
    // Predicated region
    $region18: #{tpu_custom_call.1} parent=1 // pred_check
      _
    $region19: #{tpu_custom_call.1} parent=1 // pred_check_branch
      %51 = sbr.rel (0) target = $region21
    $region20: #{tpu_custom_call.1} parent=1 // pred_region
      %s53 = ssub.s32 640, 640
      %54 = vsyncadd [#allocation12], %s53
      %s56 = sshll.u32 [#allocation11], 4
      %s57 = int_to_ptr.vmem [resolvable:$true] %s56
      %59 = dma.hbm_to_vmem [thread:$0]  %s4, 640, %s57, [#allocation12]
    $region21: #{tpu_custom_call.1} parent=1 // pred_fallthru
      _
    // Predicated region
    $region22: #{tpu_custom_call.1} parent=1 // pred_check
      _
    $region23: #{tpu_custom_call.1} parent=1 // pred_check_branch
      %61 = sbr.rel (0) target = $region25
    $region24: #{tpu_custom_call.1} parent=1 // pred_region
      %s63 = ssub.s32 640, 640
      %64 = vsyncadd [#allocation12], %s63
      %s66 = sshll.u32 [#allocation13], 4
      %s67 = int_to_ptr.vmem [resolvable:$true] %s66
      %69 = dma.hbm_to_vmem [thread:$0]  %s5, 640, %s67, [#allocation12]
    $region25: #{tpu_custom_call.1} parent=1 // pred_fallthru
      _
    // Predicated region
    $region26: #{tpu_custom_call.1} parent=1 // pred_check
      _
    $region27: #{tpu_custom_call.1} parent=1 // pred_check_branch
      %71 = sbr.rel (0) target = $region29
    $region28: #{tpu_custom_call.1} parent=1 // pred_region
      %72 = dma.done [#allocation6], 1280
    $region29: #{tpu_custom_call.1} parent=1 // pred_fallthru
      _
    // Predicated region
    $region30: #{tpu_custom_call.1} parent=1 // pred_check
      _
    $region31: #{tpu_custom_call.1} parent=1 // pred_check_branch
      %74 = sbr.rel (0) target = $region33
    $region32: #{tpu_custom_call.1} parent=1 // pred_region
      %75 = dma.done [#allocation9], 640
    $region33: #{tpu_custom_call.1} parent=1 // pred_fallthru
      _
    // Predicated region
    $region34: #{tpu_custom_call.1} parent=1 // pred_check
      _
    $region35: #{tpu_custom_call.1} parent=1 // pred_check_branch
      %77 = sbr.rel (0) target = $region37
    $region36: #{tpu_custom_call.1} parent=1 // pred_region
      %78 = dma.done [#allocation9], 640
    $region37: #{tpu_custom_call.1} parent=1 // pred_fallthru
      _
    // Predicated region
    $region38: #{tpu_custom_call.1} parent=1 // pred_check
      _
    $region39: #{tpu_custom_call.1} parent=1 // pred_check_branch
      %80 = sbr.rel (0) target = $region41
    $region40: #{tpu_custom_call.1} parent=1 // pred_region
      %81 = dma.done [#allocation12], 640
    $region41: #{tpu_custom_call.1} parent=1 // pred_fallthru
      _
    // Predicated region
    $region42: #{tpu_custom_call.1} parent=1 // pred_check
      _
    $region43: #{tpu_custom_call.1} parent=1 // pred_check_branch
      %83 = sbr.rel (0) target = $region45
    $region44: #{tpu_custom_call.1} parent=1 // pred_region
      %84 = dma.done [#allocation12], 640
    $region45: #{tpu_custom_call.1} parent=1 // pred_fallthru
      _
    %p85 = scmp.eq.s32.totalorder 0, 0
    // Predicated region
    $region46: #{tpu_custom_call.1} parent=1 // pred_check
      %p86 = pneg %p85
    $region47: #{tpu_custom_call.1} parent=1 // pred_check_branch
      %88 = sbr.rel (%p86) target = $region49
    $region48: #{tpu_custom_call.1} parent=1 // pred_region
      %89 = vst [vmem:[#allocation2] sm:$0xff] 0.0
      %90 = vst [vmem:[#allocation2 + $0x8] sm:$0xff] 0.0
      %91 = vst [vmem:[#allocation2 + $0x10] sm:$0xff] 0.0
      %92 = vst [vmem:[#allocation2 + $0x18] sm:$0xff] 0.0
      %93 = vst [vmem:[#allocation2 + $0x20] sm:$0xff] 0.0
      %94 = vst [vmem:[#allocation2 + $0x28] sm:$0xff] 0.0
      %95 = vst [vmem:[#allocation2 + $0x30] sm:$0xff] 0.0
      %96 = vst [vmem:[#allocation2 + $0x38] sm:$0xff] 0.0
      %97 = vst [vmem:[#allocation3] sm:$0xff] 0.0
      %98 = vst [vmem:[#allocation3 + $0x8] sm:$0xff] 0.0
      %99 = vst [vmem:[#allocation3 + $0x10] sm:$0xff] 0.0
      %100 = vst [vmem:[#allocation3 + $0x18] sm:$0xff] 0.0
    $region49: #{tpu_custom_call.1} parent=1 // pred_fallthru
      _
    %v101 = vld [vmem:[#allocation5] sm:$0xff]
    %v102 = vld [vmem:[#allocation5 + $0x8] sm:$0xff]
    %v103 = vld [vmem:[#allocation5 + $0x10] sm:$0xff]
    %v104 = vld [vmem:[#allocation5 + $0x18] sm:$0xff]
    %v105 = vld [vmem:[#allocation5 + $0x28] sm:$0xff]
    %v106 = vld [vmem:[#allocation5 + $0x30] sm:$0xff]
    %v107 = vld [vmem:[#allocation5 + $0x38] sm:$0xff]
    %v108 = vld [vmem:[#allocation5 + $0x40] sm:$0xff]
    %v109 = vmul.f32 %v101, %v101
    %v110 = vmul.f32 %v102, %v102
    %v111 = vmul.f32 %v103, %v103
    %v112 = vmul.f32 %v104, %v104
    %v113 = vmul.f32 %v105, %v105
    %v114 = vmul.f32 %v106, %v106
    %v115 = vmul.f32 %v107, %v107
    %v116 = vmul.f32 %v108, %v108
    %v117 = vld [vmem:[#allocation8] sm:$0xff]
    %v118 = vld [vmem:[#allocation8 + $0x8] sm:$0xff]
    %v119 = vld [vmem:[#allocation8 + $0x10] sm:$0xff]
    %v120 = vld [vmem:[#allocation8 + $0x18] sm:$0xff]
    %v121 = vld [vmem:[#allocation10] sm:$0xff]
    %v122 = vld [vmem:[#allocation10 + $0x8] sm:$0xff]
    %v123 = vld [vmem:[#allocation10 + $0x10] sm:$0xff]
    %v124 = vld [vmem:[#allocation10 + $0x18] sm:$0xff]
    %v125 = vadd.f32 %v117, %v121
    %v126 = vadd.f32 %v118, %v122
    %v127 = vadd.f32 %v119, %v123
    %v128 = vadd.f32 %v120, %v124
    %v129 = vld [vmem:[#allocation11] sm:$0xff]
    %v130 = vld [vmem:[#allocation11 + $0x8] sm:$0xff]
    %v131 = vld [vmem:[#allocation11 + $0x10] sm:$0xff]
    %v132 = vld [vmem:[#allocation11 + $0x18] sm:$0xff]
    %v133 = vadd.f32 %v125, %v129
    %v134 = vadd.f32 %v126, %v130
    %v135 = vadd.f32 %v127, %v131
    %v136 = vadd.f32 %v128, %v132
    %v137 = vld [vmem:[#allocation13] sm:$0xff]
    %v138 = vld [vmem:[#allocation13 + $0x8] sm:$0xff]
    %v139 = vld [vmem:[#allocation13 + $0x10] sm:$0xff]
    %v140 = vld [vmem:[#allocation13 + $0x18] sm:$0xff]
    %v141 = vadd.f32 %v133, %v137
    %v142 = vadd.f32 %v134, %v138
    %v143 = vadd.f32 %v135, %v139
    %v144 = vadd.f32 %v136, %v140
    %v145 = vld [vmem:[#allocation2] sm:$0xff]
    %v146 = vld [vmem:[#allocation2 + $0x8] sm:$0xff]
    %v147 = vld [vmem:[#allocation2 + $0x10] sm:$0xff]
    %v148 = vld [vmem:[#allocation2 + $0x18] sm:$0xff]
    %v149 = vld [vmem:[#allocation2 + $0x20] sm:$0xff]
    %v150 = vld [vmem:[#allocation2 + $0x28] sm:$0xff]
    %v151 = vld [vmem:[#allocation2 + $0x30] sm:$0xff]
    %v152 = vld [vmem:[#allocation2 + $0x38] sm:$0xff]
    %v153 = vadd.f32 %v145, %v109
    %v154 = vadd.f32 %v146, %v110
    %v155 = vadd.f32 %v147, %v111
    %v156 = vadd.f32 %v148, %v112
    %v157 = vadd.f32 %v149, %v113
    %v158 = vadd.f32 %v150, %v114
    %v159 = vadd.f32 %v151, %v115
    %v160 = vadd.f32 %v152, %v116
    %161 = vst [vmem:[#allocation2] sm:$0xff] %v153
    %162 = vst [vmem:[#allocation2 + $0x8] sm:$0xff] %v154
    %163 = vst [vmem:[#allocation2 + $0x10] sm:$0xff] %v155
    %164 = vst [vmem:[#allocation2 + $0x18] sm:$0xff] %v156
    %165 = vst [vmem:[#allocation2 + $0x20] sm:$0xff] %v157
    %166 = vst [vmem:[#allocation2 + $0x28] sm:$0xff] %v158
    %167 = vst [vmem:[#allocation2 + $0x30] sm:$0xff] %v159
    %168 = vst [vmem:[#allocation2 + $0x38] sm:$0xff] %v160
    %v169 = vld [vmem:[#allocation3] sm:$0xff]
    %v170 = vld [vmem:[#allocation3 + $0x8] sm:$0xff]
    %v171 = vld [vmem:[#allocation3 + $0x10] sm:$0xff]
    %v172 = vld [vmem:[#allocation3 + $0x18] sm:$0xff]
    %v173 = vadd.f32 %v169, %v141
    %v174 = vadd.f32 %v170, %v142
    %v175 = vadd.f32 %v171, %v143
    %v176 = vadd.f32 %v172, %v144
    %177 = vst [vmem:[#allocation3] sm:$0xff] %v173
    %178 = vst [vmem:[#allocation3 + $0x8] sm:$0xff] %v174
    %179 = vst [vmem:[#allocation3 + $0x10] sm:$0xff] %v175
    %180 = vst [vmem:[#allocation3 + $0x18] sm:$0xff] %v176
    %v181 = vld [vmem:[#allocation5 + $0x20] sm:$0xff]
    %v182 = vld [vmem:[#allocation5 + $0x48] sm:$0xff]
    %v183 = vmul.f32 %v181, %v181
    %v184 = vmul.f32 %v182, %v182
    %v185 = vld [vmem:[#allocation8 + $0x20] sm:$0xff]
    %v186 = vld [vmem:[#allocation10 + $0x20] sm:$0xff]
    %v187 = vadd.f32 %v185, %v186
    %v188 = vld [vmem:[#allocation11 + $0x20] sm:$0xff]
    %v189 = vadd.f32 %v187, %v188
    %v190 = vld [vmem:[#allocation13 + $0x20] sm:$0xff]
    %v191 = vadd.f32 %v189, %v190
    %v192 = vld [vmem:[#allocation2] sm:$0xff]
    %v193 = vld [vmem:[#allocation2 + $0x20] sm:$0xff]
    %v194 = vadd.f32 %v192, %v183
    %v195 = vadd.f32 %v193, %v184
    %196 = vst [vmem:[#allocation2] sm:$0xff] %v194
    %197 = vst [vmem:[#allocation2 + $0x20] sm:$0xff] %v195
    %v198 = vld [vmem:[#allocation3] sm:$0xff]
    %v199 = vadd.f32 %v198, %v191
    %200 = vst [vmem:[#allocation3] sm:$0xff] %v199
    // Predicated region
    $region50: #{tpu_custom_call.1} parent=1 // pred_check
      %p201 = pneg %p85
    $region51: #{tpu_custom_call.1} parent=1 // pred_check_branch
      %203 = sbr.rel (%p201) target = $region53
    $region52: #{tpu_custom_call.1} parent=1 // pred_region
      %v204 = vld [vmem:[#allocation2] sm:$0xff]
      %v205 = vld [vmem:[#allocation2 + $0x8] sm:$0xff]
      %v206 = vld [vmem:[#allocation2 + $0x10] sm:$0xff]
      %v207 = vld [vmem:[#allocation2 + $0x18] sm:$0xff]
      %v208 = vld [vmem:[#allocation2 + $0x20] sm:$0xff]
      %v209 = vld [vmem:[#allocation2 + $0x28] sm:$0xff]
      %v210 = vld [vmem:[#allocation2 + $0x30] sm:$0xff]
      %v211 = vld [vmem:[#allocation2 + $0x38] sm:$0xff]
      %v212 = vadd.f32 %v204, %v205
      %v213 = vadd.f32 %v212, %v206
      %v214 = vadd.f32 %v213, %v207
      %v215 = vadd.f32 %v214, %v208
      %v216 = vadd.f32 %v215, %v209
      %v217 = vadd.f32 %v216, %v210
      %v218 = vadd.f32 %v217, %v211
      %219 = vadd.xlane.f32.xlu0 %v218
      %v220 = vpop.xlane.xlu0 %219
      %v221 = vrot.slane %v220, 4
      %v222 = vadd.f32 %v220, %v221
      %v223 = vrot.slane %v222, 2
      %v224 = vadd.f32 %v222, %v223
      %v225 = vrot.slane %v224, 1
      %v226 = vadd.f32 %v224, %v225
      %s227 = vtos %v226
      %v228 = vld [vmem:[#allocation3] sm:$0xff]
      %v229 = vld [vmem:[#allocation3 + $0x8] sm:$0xff]
      %v230 = vld [vmem:[#allocation3 + $0x10] sm:$0xff]
      %v231 = vld [vmem:[#allocation3 + $0x18] sm:$0xff]
      %v232 = vadd.f32 %v228, %v229
      %v233 = vadd.f32 %v232, %v230
      %v234 = vadd.f32 %v233, %v231
      %235 = vadd.xlane.f32.xlu0 %v234
      %v236 = vpop.xlane.xlu0 %235
      %v237 = vrot.slane %v236, 4
      %v238 = vadd.f32 %v236, %v237
      %v239 = vrot.slane %v238, 2
      %v240 = vadd.f32 %v238, %v239
      %v241 = vrot.slane %v240, 1
      %v242 = vadd.f32 %v240, %v241
      %s243 = vtos %v242
      %s244 = sld [smem:[#allocation4]]
      %s245 = smul.f32 %s227, 1.3888888
      %s246 = ssub.f32 %s245, %s243
      %s247 = ssub.f32 %s246, %s244
      %s248 = smul.f32 %s247, 9.765625e-05
      %s249 = scalar_lea.smem [#allocation14], 0
      %250 = sst [smem:[%s249]] %s248
    $region53: #{tpu_custom_call.1} parent=1 // pred_fallthru
      _
    // Predicated region
    $region54: #{tpu_custom_call.1} parent=1 // pred_check
      _
    $region55: #{tpu_custom_call.1} parent=1 // pred_check_branch
      %252 = sbr.rel (0) target = $region57
    $region56: #{tpu_custom_call.1} parent=1 // pred_region
      %s254 = ssub.s32 16, 16
      %255 = vsyncadd [#allocation7], %s254
      %258 = dma.smem_to_hbm [#allocation14], 16, %s6, [#allocation7]
    $region57: #{tpu_custom_call.1} parent=1 // pred_fallthru
      _
    // Predicated region
    $region58: #{tpu_custom_call.1} parent=1 // pred_check
      _
    $region59: #{tpu_custom_call.1} parent=1 // pred_check_branch
      %260 = sbr.rel (0) target = $region61
    $region60: #{tpu_custom_call.1} parent=1 // pred_region
      %261 = dma.done [#allocation7], 16
    $region61: #{tpu_custom_call.1} parent=1 // pred_fallthru
      _
    %262 = sfence
    %263 = vsyncpa [#allocation6], 1
    %264 = vsyncpa [#allocation9], 1
    %265 = vsyncpa [#allocation12], 1
    %266 = vsyncpa [#allocation7], 1

</llo_original>
